<compile_context>
chip_gen: v7x
topology: tpu7x:2x2x1
jax: 0.10.0
libtpu: 0.0.40
codegen_flags: <defaults>
</compile_context>

<pallas_src>
import jax
import jax.numpy as jnp
from jax.experimental import pallas as pl
from jax.experimental.pallas import tpu as pltpu


def numscore_kernel(
    img_ref,    # (TB*S_pad, D) bf16 -- TB images' ViT tokens, flattened
    wimg_ref,   # (D, C)        bf16 == conv_images.weight[:, :, 0, 0].T (resident)
    bimg_ref,   # (1, C)        f32  (resident)
    ftT_ref,    # (C, Bt_pad)   f32  == (txt @ w_txt + b_txt).T        (resident)
    ftnT_ref,   # (C, Bt_pad)   f32  == L2-normalized text, transposed (resident)
    wi2t_ref,   # (S_pad, C)    f32  scoring_i2t weight, pre-broadcast over C
    wt2i_ref,   # (S_pad, C)    f32  scoring_t2i weight, pre-broadcast over C
    bi2t_ref,   # (1, 1)        f32  (SMEM scalar)
    bt2i_ref,   # (1, 1)        f32  (SMEM scalar)
    i2t_ref,    # (TB, Bt_pad)  f32 out: rows of i2t
    t2iT_ref,   # (TB, Bt_pad)  f32 out: rows of t2i^T
):
    S_pad, C = wi2t_ref.shape
    TB = i2t_ref.shape[0]

    # 1x1 conv == per-token Linear(D -> C): one big bf16 MXU pass, f32 accumulation.
    fi = jnp.dot(img_ref[...], wimg_ref[...],
                 preferred_element_type=jnp.float32) + bimg_ref[...]     # (TB*S_pad, C)

    # Per-token L2 normalisation (torch .norm(), no eps) via rsqrt -> EUP slot.
    fi_n = fi * jax.lax.rsqrt(jnp.sum(fi * fi, axis=1, keepdims=True))

    # Linear(S, 1) scoring folded into weighted token reductions (VPU mul + XLU
    # sublane reduce).  S_pad is a multiple of 16, so this reshape is a
    # layout-trivial split of the sublane axis.
    fi3 = fi.reshape(TB, S_pad, C)
    fin3 = fi_n.reshape(TB, S_pad, C)
    ri = jnp.sum(fi3 * wi2t_ref[...], axis=1)     # (TB, C)
    rn = jnp.sum(fin3 * wt2i_ref[...], axis=1)    # (TB, C)

    # Batched cross-modal matmuls against the hoisted, pre-transposed text
    # features: (TB, C) x (C, Bt_pad) -> (TB, Bt_pad), f32.
    i2t_ref[...] = jnp.dot(ri, ftnT_ref[...],
                           preferred_element_type=jnp.float32) + bi2t_ref[0, 0]
    t2iT_ref[...] = jnp.dot(rn, ftT_ref[...],
                            preferred_element_type=jnp.float32) + bt2i_ref[0, 0]


def vit_numscore_forward(img_emb, txt_emb, params, tb_max=16):
    """img_emb: (B_i, S, D) ViT last_hidden_state; txt_emb: (B_t, D) BERT sentence emb."""
    Bi, S, D = img_emb.shape
    Bt = txt_emb.shape[0]
    C = params["w_img"].shape[1]

    # ---- Hoisted text branch (identical for every image; computed once) ----
    ft = jnp.dot(txt_emb.astype(jnp.bfloat16), params["w_txt"].astype(jnp.bfloat16),
                 preferred_element_type=jnp.float32) + params["b_txt"]          # (Bt, C)
    ft_n = ft * jax.lax.rsqrt(jnp.sum(ft * ft, axis=1, keepdims=True))
    Bt_pad = pl.cdiv(Bt, 128) * 128                     # lane-dense output stores
    ftT = jnp.zeros((C, Bt_pad), jnp.float32).at[:, :Bt].set(ft.T)
    ftnT = jnp.zeros((C, Bt_pad), jnp.float32).at[:, :Bt].set(ft_n.T)

    # ---- Image-side batching & padding ----
    TB = min(tb_max, Bi)                  # Bi<16 -> TB==Bi (block == full dim, OK);
    Bi_pad = pl.cdiv(Bi, TB) * TB         # Bi>=16 -> TB==16 (multiple of 8, OK).
    S_pad = pl.cdiv(S, 16) * 16           # sublane-aligned for the in-kernel reshape
    img = jnp.pad(img_emb, ((0, Bi_pad - Bi), (0, S_pad - S), (0, 0)), mode="edge")
    img2d = img.reshape(Bi_pad * S_pad, D).astype(jnp.bfloat16)

    w_img = params["w_img"].astype(jnp.bfloat16)

    # Scoring Linear(S,1) weights: zero-pad to S_pad (padded tokens contribute 0),
    # pre-broadcast to (S_pad, C) rows so the in-kernel weighting is a plain
    # elementwise multiply (no lane broadcast / (S,1) column padding).
    wi2t = jnp.zeros((S_pad,), jnp.float32).at[:S].set(params["w_i2t"][0])
    wt2i = jnp.zeros((S_pad,), jnp.float32).at[:S].set(params["w_t2i"][0])
    wi2t_b = jnp.broadcast_to(wi2t[:, None], (S_pad, C))
    wt2i_b = jnp.broadcast_to(wt2i[:, None], (S_pad, C))

    num_blocks = Bi_pad // TB

    cost = pl.CostEstimate(
        flops=2 * Bi_pad * S_pad * D * C        # image conv matmul
              + 4 * Bi_pad * S_pad * C          # norms + weighted reductions
              + 4 * Bi_pad * C * Bt_pad,        # cross-modal matmuls
        transcendentals=Bi_pad * S_pad,         # rsqrt per token
        bytes_accessed=Bi_pad * S_pad * D * 2   # bf16 image tokens
                       + D * C * 2 + 2 * C * Bt_pad * 4 + 2 * S_pad * C * 4
                       + 2 * Bi_pad * Bt_pad * 4,
    )

    def resident(shape):
        nd = len(shape)
        return pl.BlockSpec(shape, lambda b, nd=nd: (0,) * nd)

    smem = pl.BlockSpec(memory_space=pltpu.MemorySpace.SMEM)

    i2t_p, t2iT_p = pl.pallas_call(
        numscore_kernel,
        grid=(num_blocks,),
        in_specs=[
            pl.BlockSpec((TB * S_pad, D), lambda b: (b, 0)),   # TB images per step
            resident((D, C)), resident((1, C)),                # conv_images W, b
            resident((C, Bt_pad)), resident((C, Bt_pad)),      # ft^T, ft_n^T (hoisted)
            resident((S_pad, C)), resident((S_pad, C)),        # scoring weight rows
            smem, smem,                                        # scalar scoring biases
        ],
        out_specs=(
            pl.BlockSpec((TB, Bt_pad), lambda b: (b, 0)),
            pl.BlockSpec((TB, Bt_pad), lambda b: (b, 0)),
        ),
        out_shape=(
            jax.ShapeDtypeStruct((Bi_pad, Bt_pad), jnp.float32),
            jax.ShapeDtypeStruct((Bi_pad, Bt_pad), jnp.float32),
        ),
        compiler_params=pltpu.CompilerParams(
            dimension_semantics=("parallel",),        # v7x: shard image blocks across TCs
            vmem_limit_bytes=48 * 1024 * 1024,        # < 64 MiB v7x physical
        ),
        cost_estimate=cost,
    )(
        img2d, w_img, params["b_img"], ftT, ftnT,
        wi2t_b, wt2i_b, params["b_i2t"], params["b_t2i"],
    )

    i2t = i2t_p[:Bi, :Bt]              # (B_i, B_t)
    t2i = t2iT_p[:Bi, :Bt].T           # (B_t, B_i) == torch .transpose(0, 1)
    return i2t, t2i


# ----------------------------------------------------------------------------
# Backbone stand-ins (plain JAX glue, deterministic synthetic weights).
# ----------------------------------------------------------------------------
def vit_patch_embed_stub(images, w_patch, cls_token, patch):
    # TODO(synk): the pretrained ViT encoder ('google/vit-base-patch16-224-in21k')
    # has no clean Pallas equivalent here; we emulate only patch-embedding + [CLS]
    # so downstream code sees a (B, S, D) last_hidden_state of the right shape.
    B, Cc, H, W = images.shape
    ph, pw = H // patch, W // patch
    x = images.reshape(B, Cc, ph, patch, pw, patch)
    x = x.transpose(0, 2, 4, 1, 3, 5).reshape(B, ph * pw, Cc * patch * patch)
    tok = x @ w_patch                                   # (B, n_patches, D)
    cls = jnp.broadcast_to(cls_token, (B, 1, w_patch.shape[1]))
    return jnp.concatenate([cls, tok], axis=1)          # (B, S, D)


def bert_sentence_embed_stub(input_ids, token_type_ids, attention_mask, emb_table):
    # TODO(synk): the pretrained SentenceTransformer ('bert-base-nli-stsb-mean-tokens')
    # has no clean Pallas equivalent; emulate token lookup + masked mean pooling.
    del token_type_ids
    tok = emb_table[input_ids]                          # (B_t, L, D)
    m = attention_mask[..., None].astype(tok.dtype)
    return (tok * m).sum(axis=1) / jnp.maximum(m.sum(axis=1), 1.0)


def reference(img_emb, txt_emb, p):
    """Pure-JAX mirror of the PyTorch forward (post-backbone).

    Conv matmuls use bf16 inputs + f32 accumulation to match the kernel's MXU
    dtype policy; everything else is f32.
    """
    fi = jnp.einsum(
        "bsd,dc->bsc",
        img_emb.astype(jnp.bfloat16), p["w_img"].astype(jnp.bfloat16),
        preferred_element_type=jnp.float32,
    ) + p["b_img"][0]
    ft = jnp.dot(
        txt_emb.astype(jnp.bfloat16), p["w_txt"].astype(jnp.bfloat16),
        preferred_element_type=jnp.float32,
    ) + p["b_txt"][0]
    fi_n = fi / jnp.linalg.norm(fi, axis=2, keepdims=True)
    ft_n = ft / jnp.linalg.norm(ft, axis=1, keepdims=True)
    i2t = jnp.einsum("bsc,tc->bst", fi, ft_n)
    t2i = jnp.einsum("bsc,tc->bst", fi_n, ft)
    i2t = jnp.einsum("bst,s->bt", i2t, p["w_i2t"][0]) + p["b_i2t"][0, 0]
    t2i = (jnp.einsum("bst,s->bt", t2i, p["w_t2i"][0]) + p["b_t2i"][0, 0]).T
    return i2t, t2i


if __name__ == "__main__":
    key = jax.random.PRNGKey(0)
    B_i, B_t = 2, 3             # image batch, text batch (>1 so torch .squeeze is benign)
    Cc, H, W, P = 3, 16, 16, 8  # images_inputs are NCHW (PyTorch conv convention)
    L, V = 8, 100               # text length, vocab
    D, C = 32, 16               # hidden (768 -> 32), conv out channels (512 -> 16)
    S = (H // P) * (W // P) + 1  # tokens incl. [CLS] (197 -> 5)

    keys = jax.random.split(key, 12)
    images_inputs = jax.random.normal(keys[0], (B_i, Cc, H, W), jnp.float32)
    input_ids = jax.random.randint(keys[1], (B_t, L), 0, V)
    token_type_ids = jnp.zeros((B_t, L), jnp.int32)
    attention_masks = jnp.ones((B_t, L), jnp.int32)

    # Deterministic synthetic parameters (module __init__ shapes, scaled down).
    w_patch = 0.02 * jax.random.normal(keys[2], (Cc * P * P, D), jnp.float32)
    cls_token = 0.02 * jax.random.normal(keys[3], (1, 1, D), jnp.float32)
    emb_table = 0.02 * jax.random.normal(keys[4], (V, D), jnp.float32)

    params = {
        # conv_images / conv_text weights stored as (D, C) == torch_weight[:,:,0,0].T
        "w_img": 0.05 * jax.random.normal(keys[5], (D, C), jnp.float32),
        "b_img": 0.05 * jax.random.normal(keys[6], (1, C), jnp.float32),
        "w_txt": 0.05 * jax.random.normal(keys[7], (D, C), jnp.float32),
        "b_txt": 0.05 * jax.random.normal(keys[8], (1, C), jnp.float32),
        # scoring heads: Linear(S, 1) -> weight (1, S), bias (1, 1)
        "w_i2t": 0.05 * jax.random.normal(keys[9], (1, S), jnp.float32),
        "b_i2t": 0.05 * jax.random.normal(keys[10], (1, 1), jnp.float32),
        "w_t2i": 0.05 * jax.random.normal(keys[11], (1, S), jnp.float32),
        "b_t2i": jnp.zeros((1, 1), jnp.float32),
    }

    img_emb = vit_patch_embed_stub(images_inputs, w_patch, cls_token, P)      # (B_i, S, D)
    txt_emb = bert_sentence_embed_stub(input_ids, token_type_ids,
                                       attention_masks, emb_table)            # (B_t, D)

    i2t, t2i = vit_numscore_forward(img_emb, txt_emb, params)
    jax.block_until_ready((i2t, t2i))

    i2t_ref, t2i_ref = reference(img_emb, txt_emb, params)
    assert i2t.shape == (B_i, B_t) and t2i.shape == (B_t, B_i)
    assert jnp.allclose(i2t, i2t_ref, rtol=2e-3, atol=2e-3), "i2t mismatch"
    assert jnp.allclose(t2i, t2i_ref, rtol=2e-3, atol=2e-3), "t2i mismatch"
    print("KERNEL_OK")
</pallas_src>

<mosaic_0001>
module attributes {stable_mosaic.version = 11 : i64} {
  func.func @numscore_kernel(%arg0: i32, %arg1: memref<32x32xbf16, #tpu.memory_space<vmem>>, %arg2: memref<32x16xbf16, #tpu.memory_space<vmem>>, %arg3: memref<1x16xf32, #tpu.memory_space<vmem>>, %arg4: memref<16x128xf32, #tpu.memory_space<vmem>>, %arg5: memref<16x128xf32, #tpu.memory_space<vmem>>, %arg6: memref<16x16xf32, #tpu.memory_space<vmem>>, %arg7: memref<16x16xf32, #tpu.memory_space<vmem>>, %arg8: memref<1x1xf32, #tpu.memory_space<smem>>, %arg9: memref<1x1xf32, #tpu.memory_space<smem>>, %arg10: memref<2x128xf32, #tpu.memory_space<vmem>>, %arg11: memref<2x128xf32, #tpu.memory_space<vmem>>) attributes {dimension_semantics = [#tpu.dimension_semantics<parallel>], iteration_bounds = array<i64: 1>, scalar_prefetch = 0 : i64, scratch_operands = 0 : i64, tpu.core_type = #tpu.core_type<tc>, window_params = [{transform_indices = @transform_0, window_bounds = array<i64: 32, 32>}, {pipeline_mode = #tpu.pipeline_mode<synchronous>, transform_indices = @transform_1, window_bounds = array<i64: 32, 16>}, {pipeline_mode = #tpu.pipeline_mode<synchronous>, transform_indices = @transform_2, window_bounds = array<i64: 1, 16>}, {pipeline_mode = #tpu.pipeline_mode<synchronous>, transform_indices = @transform_3, window_bounds = array<i64: 16, 128>}, {pipeline_mode = #tpu.pipeline_mode<synchronous>, transform_indices = @transform_4, window_bounds = array<i64: 16, 128>}, {pipeline_mode = #tpu.pipeline_mode<synchronous>, transform_indices = @transform_5, window_bounds = array<i64: 16, 16>}, {pipeline_mode = #tpu.pipeline_mode<synchronous>, transform_indices = @transform_6, window_bounds = array<i64: 16, 16>}, {transform_indices = @transform_7, window_bounds = array<i64: 1, 1>}, {transform_indices = @transform_8, window_bounds = array<i64: 1, 1>}, {transform_indices = @transform_9, window_bounds = array<i64: 2, 128>}, {transform_indices = @transform_10, window_bounds = array<i64: 2, 128>}]} {
    %c0 = arith.constant 0 : index
    %c0_0 = arith.constant 0 : index
    %0 = vector.load %arg1[%c0, %c0_0] : memref<32x32xbf16, #tpu.memory_space<vmem>>, vector<32x32xbf16>
    %c0_1 = arith.constant 0 : index
    %c0_2 = arith.constant 0 : index
    %1 = vector.load %arg2[%c0_1, %c0_2] : memref<32x16xbf16, #tpu.memory_space<vmem>>, vector<32x16xbf16>
    %cst = arith.constant dense<0.000000e+00> : vector<32x16xf32>
    %2 = tpu.matmul %0, %1, %cst {dimension_numbers = #tpu.dot_dimension_numbers<[1], [0], [0], [1], [0, 0, 1, 1], [], []>} : vector<32x32xbf16>, vector<32x16xbf16>, vector<32x16xf32> -> vector<32x16xf32>
    %c0_3 = arith.constant 0 : index
    %c0_4 = arith.constant 0 : index
    %3 = vector.load %arg3[%c0_3, %c0_4] : memref<1x16xf32, #tpu.memory_space<vmem>>, vector<1x16xf32>
    %4 = vector.broadcast %3 : vector<1x16xf32> to vector<32x16xf32>
    %5 = arith.addf %2, %4 : vector<32x16xf32>
    %6 = arith.mulf %5, %5 : vector<32x16xf32>
    %cst_5 = arith.constant dense<0.000000e+00> : vector<32xf32>
    %7 = vector.multi_reduction <add>, %6, %cst_5 [1] : vector<32x16xf32> to vector<32xf32>
    %8 = vector.shape_cast %7 : vector<32xf32> to vector<32x1xf32>
    %9 = math.rsqrt %8 : vector<32x1xf32>
    %10 = vector.broadcast %9 : vector<32x1xf32> to vector<32x16xf32>
    %11 = arith.mulf %5, %10 : vector<32x16xf32>
    %12 = vector.shape_cast %5 : vector<32x16xf32> to vector<2x16x16xf32>
    %13 = vector.shape_cast %11 : vector<32x16xf32> to vector<2x16x16xf32>
    %c0_6 = arith.constant 0 : index
    %c0_7 = arith.constant 0 : index
    %14 = vector.load %arg6[%c0_6, %c0_7] : memref<16x16xf32, #tpu.memory_space<vmem>>, vector<16x16xf32>
    %15 = vector.shape_cast %14 : vector<16x16xf32> to vector<1x16x16xf32>
    %16 = vector.broadcast %15 : vector<1x16x16xf32> to vector<2x16x16xf32>
    %17 = arith.mulf %12, %16 : vector<2x16x16xf32>
    %cst_8 = arith.constant dense<0.000000e+00> : vector<2x16xf32>
    %18 = vector.multi_reduction <add>, %17, %cst_8 [1] : vector<2x16x16xf32> to vector<2x16xf32>
    %c0_9 = arith.constant 0 : index
    %c0_10 = arith.constant 0 : index
    %19 = vector.load %arg7[%c0_9, %c0_10] : memref<16x16xf32, #tpu.memory_space<vmem>>, vector<16x16xf32>
    %20 = vector.shape_cast %19 : vector<16x16xf32> to vector<1x16x16xf32>
    %21 = vector.broadcast %20 : vector<1x16x16xf32> to vector<2x16x16xf32>
    %22 = arith.mulf %13, %21 : vector<2x16x16xf32>
    %cst_11 = arith.constant dense<0.000000e+00> : vector<2x16xf32>
    %23 = vector.multi_reduction <add>, %22, %cst_11 [1] : vector<2x16x16xf32> to vector<2x16xf32>
    %c0_12 = arith.constant 0 : index
    %c0_13 = arith.constant 0 : index
    %24 = vector.load %arg5[%c0_12, %c0_13] : memref<16x128xf32, #tpu.memory_space<vmem>>, vector<16x128xf32>
    %cst_14 = arith.constant dense<0.000000e+00> : vector<2x128xf32>
    %25 = tpu.matmul %18, %24, %cst_14 {dimension_numbers = #tpu.dot_dimension_numbers<[1], [0], [0], [1], [0, 0, 1, 1], [], []>} : vector<2x16xf32>, vector<16x128xf32>, vector<2x128xf32> -> vector<2x128xf32>
    %c0_15 = arith.constant 0 : index
    %c0_16 = arith.constant 0 : index
    %26 = memref.load %arg8[%c0_15, %c0_16] : memref<1x1xf32, #tpu.memory_space<smem>>
    %27 = vector.broadcast %26 : f32 to vector<2x128xf32>
    %28 = arith.addf %25, %27 : vector<2x128xf32>
    %c0_17 = arith.constant 0 : index
    %c0_18 = arith.constant 0 : index
    %29 = vector.load %arg10[%c0_17, %c0_18] : memref<2x128xf32, #tpu.memory_space<vmem>>, vector<2x128xf32>
    tpu.vector_store %arg10[%c0_17, %c0_18], %28 {strides = array<i32>} : memref<2x128xf32, #tpu.memory_space<vmem>>, vector<2x128xf32>,
    %c0_19 = arith.constant 0 : index
    %c0_20 = arith.constant 0 : index
    %30 = vector.load %arg4[%c0_19, %c0_20] : memref<16x128xf32, #tpu.memory_space<vmem>>, vector<16x128xf32>
    %cst_21 = arith.constant dense<0.000000e+00> : vector<2x128xf32>
    %31 = tpu.matmul %23, %30, %cst_21 {dimension_numbers = #tpu.dot_dimension_numbers<[1], [0], [0], [1], [0, 0, 1, 1], [], []>} : vector<2x16xf32>, vector<16x128xf32>, vector<2x128xf32> -> vector<2x128xf32>
    %c0_22 = arith.constant 0 : index
    %c0_23 = arith.constant 0 : index
    %32 = memref.load %arg9[%c0_22, %c0_23] : memref<1x1xf32, #tpu.memory_space<smem>>
    %33 = vector.broadcast %32 : f32 to vector<2x128xf32>
    %34 = arith.addf %31, %33 : vector<2x128xf32>
    %c0_24 = arith.constant 0 : index
    %c0_25 = arith.constant 0 : index
    %35 = vector.load %arg11[%c0_24, %c0_25] : memref<2x128xf32, #tpu.memory_space<vmem>>, vector<2x128xf32>
    tpu.vector_store %arg11[%c0_24, %c0_25], %34 {strides = array<i32>} : memref<2x128xf32, #tpu.memory_space<vmem>>, vector<2x128xf32>,
    return
  }
  func.func @transform_0(%arg0: i32) -> (i32, i32) {
    %c0_i32 = arith.constant 0 : i32
    %c0_i32_0 = arith.constant 0 : i32
    return %arg0, %c0_i32 : i32, i32
  }
  func.func @transform_1(%arg0: i32) -> (i32, i32) {
    %c0_i32 = arith.constant 0 : i32
    %c0_i32_0 = arith.constant 0 : i32
    %c0_i32_1 = arith.constant 0 : i32
    return %c0_i32, %c0_i32_0 : i32, i32
  }
  func.func @transform_2(%arg0: i32) -> (i32, i32) {
    %c0_i32 = arith.constant 0 : i32
    %c0_i32_0 = arith.constant 0 : i32
    %c0_i32_1 = arith.constant 0 : i32
    return %c0_i32, %c0_i32_0 : i32, i32
  }
  func.func @transform_3(%arg0: i32) -> (i32, i32) {
    %c0_i32 = arith.constant 0 : i32
    %c0_i32_0 = arith.constant 0 : i32
    %c0_i32_1 = arith.constant 0 : i32
    return %c0_i32, %c0_i32_0 : i32, i32
  }
  func.func @transform_4(%arg0: i32) -> (i32, i32) {
    %c0_i32 = arith.constant 0 : i32
    %c0_i32_0 = arith.constant 0 : i32
    %c0_i32_1 = arith.constant 0 : i32
    return %c0_i32, %c0_i32_0 : i32, i32
  }
  func.func @transform_5(%arg0: i32) -> (i32, i32) {
    %c0_i32 = arith.constant 0 : i32
    %c0_i32_0 = arith.constant 0 : i32
    %c0_i32_1 = arith.constant 0 : i32
    return %c0_i32, %c0_i32_0 : i32, i32
  }
  func.func @transform_6(%arg0: i32) -> (i32, i32) {
    %c0_i32 = arith.constant 0 : i32
    %c0_i32_0 = arith.constant 0 : i32
    %c0_i32_1 = arith.constant 0 : i32
    return %c0_i32, %c0_i32_0 : i32, i32
  }
  func.func @transform_7(%arg0: i32) -> (i32, i32) {
    %c0_i32 = arith.constant 0 : i32
    %c0_i32_0 = arith.constant 0 : i32
    %c0_i32_1 = arith.constant 0 : i32
    return %c0_i32, %c0_i32_0 : i32, i32
  }
  func.func @transform_8(%arg0: i32) -> (i32, i32) {
    %c0_i32 = arith.constant 0 : i32
    %c0_i32_0 = arith.constant 0 : i32
    %c0_i32_1 = arith.constant 0 : i32
    return %c0_i32, %c0_i32_0 : i32, i32
  }
  func.func @transform_9(%arg0: i32) -> (i32, i32) {
    %c0_i32 = arith.constant 0 : i32
    %c0_i32_0 = arith.constant 0 : i32
    return %arg0, %c0_i32 : i32, i32
  }
  func.func @transform_10(%arg0: i32) -> (i32, i32) {
    %c0_i32 = arith.constant 0 : i32
    %c0_i32_0 = arith.constant 0 : i32
    return %arg0, %c0_i32 : i32, i32
  }
}

</mosaic_0001>

<llo_original>
// kernel: tpu_custom_call.1
$region0: #{tpu_custom_call.1}
  #allocation0 [shape = 'u32[]', space=smem, size = 0x4, offset = 0x4, fixed_abs, tag = 'smem constant byte address 0x4 - core index']
  #allocation1 [shape = 'u32[144,128]{1,0:T(1,128)}', space=vmem, size = 0x12000, scoped, tag = 'internal scratch']
  #allocation2 [shape = 'f32[1,1]{1,0:T(1,128)S(6)}', space=smem, size = 0x200, scoped, tag = 'scoped memory for tpu_custom_call.1']
  #allocation3 [shape = 'f32[1,1]{1,0:T(1,128)S(6)}', space=smem, size = 0x200, scoped, tag = 'scoped memory for tpu_custom_call.1']
  %s0 = inlined_call_operand.vmem [shape: bf16[32,32], index: 0, kind: input, shape index: {}]
  %s1 = inlined_call_operand.vmem [shape: bf16[32,16], index: 1, kind: input, shape index: {}]
  %s2 = inlined_call_operand.vmem [shape: f32[1,16], index: 2, kind: input, shape index: {}]
  %s3 = inlined_call_operand.vmem [shape: f32[16,128], index: 3, kind: input, shape index: {}]
  %s4 = inlined_call_operand.hbm [shape: f32[16,128], index: 4, kind: input, shape index: {}]
  %s5 = inlined_call_operand.vmem [shape: f32[16,16], index: 5, kind: input, shape index: {}]
  %s6 = inlined_call_operand.hbm [shape: f32[16,16], index: 6, kind: input, shape index: {}]
  %s7 = inlined_call_operand.<no memory space> [shape: f32[1,1], index: 7, kind: input, shape index: {}]
  %s8 = inlined_call_operand.<no memory space> [shape: f32[1,1], index: 8, kind: input, shape index: {}]
  %s9 = inlined_call_operand.hbm [shape: f32[2,128], index: 9, kind: output, shape index: {0}]
  %s10 = inlined_call_operand.hbm [shape: f32[2,128], index: 10, kind: output, shape index: {1}]
  %11 = xla_tuple %s9, %s10
  %s12 = sld [smem:[#allocation0]]
  $region62: #{tpu_custom_call.1} parent=0
    _
  %s14 = ssub.s32 1, %s12
  %s15 = scalar_select 0, %s14, %s12
  %16 = sst [smem:[#allocation2]] %s7
  %17 = sst [smem:[#allocation3]] %s8
  $region1: #{tpu_custom_call.1} parent=0
    #allocation4 [shape = 'u8[8192]{0}', space=vmem, size = 0x2000, scoped, tag = 'input window, operand 4, single buffered']
    #allocation5 [shape = 's32[1]{0}', space=sflag, size = 0x4, scoped, tag = 'scoped memory for tpu_custom_call.1']
    #allocation6 [shape = 's32[1]{0}', space=sflag, size = 0x4, scoped, tag = 'scoped memory for tpu_custom_call.1']
    #allocation7 [shape = 'u8[8192]{0}', space=vmem, size = 0x2000, scoped, tag = 'input window, operand 6, single buffered']
    #allocation8 [shape = 's32[1]{0}', space=sflag, size = 0x4, scoped, tag = 'scoped memory for tpu_custom_call.1']
    #allocation9 [shape = 'u8[1024]{0}', space=vmem, size = 0x400, scoped, tag = 'output window, operand 0, single buffered']
    #allocation10 [shape = 'u8[1024]{0}', space=vmem, size = 0x400, scoped, tag = 'output window, operand 1, single buffered']
    #allocation11 [shape = 's32[1]{0}', space=sflag, size = 0x4, scoped, tag = 'scoped memory for tpu_custom_call.1']
    %18 = vsyncpa [#allocation5], 0
    %19 = vsyncpa [#allocation8], 0
    %20 = vsyncpa [#allocation6], 0
    %21 = vsyncpa [#allocation11], 0
    // Predicated region
    $region2: #{tpu_custom_call.1} parent=1 // pred_check
      _
    $region3: #{tpu_custom_call.1} parent=1 // pred_check_branch
      %23 = sbr.rel (0) target = $region5
    $region4: #{tpu_custom_call.1} parent=1 // pred_region
      _
    $region5: #{tpu_custom_call.1} parent=1 // pred_fallthru
      _
    // Predicated region
    $region6: #{tpu_custom_call.1} parent=1 // pred_check
      _
    $region7: #{tpu_custom_call.1} parent=1 // pred_check_branch
      %25 = sbr.rel (0) target = $region9
    $region8: #{tpu_custom_call.1} parent=1 // pred_region
      _
    $region9: #{tpu_custom_call.1} parent=1 // pred_fallthru
      _
    // Predicated region
    $region10: #{tpu_custom_call.1} parent=1 // pred_check
      _
    $region11: #{tpu_custom_call.1} parent=1 // pred_check_branch
      %27 = sbr.rel (0) target = $region13
    $region12: #{tpu_custom_call.1} parent=1 // pred_region
      _
    $region13: #{tpu_custom_call.1} parent=1 // pred_fallthru
      _
    // Predicated region
    $region14: #{tpu_custom_call.1} parent=1 // pred_check
      _
    $region15: #{tpu_custom_call.1} parent=1 // pred_check_branch
      %29 = sbr.rel (0) target = $region17
    $region16: #{tpu_custom_call.1} parent=1 // pred_region
      _
    $region17: #{tpu_custom_call.1} parent=1 // pred_fallthru
      _
    // Predicated region
    $region18: #{tpu_custom_call.1} parent=1 // pred_check
      _
    $region19: #{tpu_custom_call.1} parent=1 // pred_check_branch
      %31 = sbr.rel (0) target = $region21
    $region20: #{tpu_custom_call.1} parent=1 // pred_region
      %s33 = ssub.s32 256, 256
      %34 = vsyncadd [#allocation5], %s33
      %s35 = sshll.u32 [#allocation4], 4
      %s36 = int_to_ptr.vmem [resolvable:$true] %s35
      %41 = dma.hbm_to_vmem [thread:$0]  %s4, 256, %s36, [#allocation5], 128, 128, 8
    $region21: #{tpu_custom_call.1} parent=1 // pred_fallthru
      _
    // Predicated region
    $region22: #{tpu_custom_call.1} parent=1 // pred_check
      _
    $region23: #{tpu_custom_call.1} parent=1 // pred_check_branch
      %43 = sbr.rel (0) target = $region25
    $region24: #{tpu_custom_call.1} parent=1 // pred_region
      _
    $region25: #{tpu_custom_call.1} parent=1 // pred_fallthru
      _
    // Predicated region
    $region26: #{tpu_custom_call.1} parent=1 // pred_check
      _
    $region27: #{tpu_custom_call.1} parent=1 // pred_check_branch
      %45 = sbr.rel (0) target = $region29
    $region28: #{tpu_custom_call.1} parent=1 // pred_region
      %s47 = ssub.s32 256, 256
      %48 = vsyncadd [#allocation8], %s47
      %s49 = sshll.u32 [#allocation7], 4
      %s50 = int_to_ptr.vmem [resolvable:$true] %s49
      %55 = dma.hbm_to_vmem [thread:$0]  %s6, 256, %s50, [#allocation8], 128, 128, 8
    $region29: #{tpu_custom_call.1} parent=1 // pred_fallthru
      _
    // Predicated region
    $region30: #{tpu_custom_call.1} parent=1 // pred_check
      _
    $region31: #{tpu_custom_call.1} parent=1 // pred_check_branch
      %57 = sbr.rel (0) target = $region33
    $region32: #{tpu_custom_call.1} parent=1 // pred_region
      _
    $region33: #{tpu_custom_call.1} parent=1 // pred_fallthru
      _
    // Predicated region
    $region34: #{tpu_custom_call.1} parent=1 // pred_check
      _
    $region35: #{tpu_custom_call.1} parent=1 // pred_check_branch
      %59 = sbr.rel (0) target = $region37
    $region36: #{tpu_custom_call.1} parent=1 // pred_region
      _
    $region37: #{tpu_custom_call.1} parent=1 // pred_fallthru
      _
    // Predicated region
    $region38: #{tpu_custom_call.1} parent=1 // pred_check
      _
    $region39: #{tpu_custom_call.1} parent=1 // pred_check_branch
      %61 = sbr.rel (0) target = $region41
    $region40: #{tpu_custom_call.1} parent=1 // pred_region
      %62 = dma.done [#allocation5], 256
    $region41: #{tpu_custom_call.1} parent=1 // pred_fallthru
      _
    // Predicated region
    $region42: #{tpu_custom_call.1} parent=1 // pred_check
      _
    $region43: #{tpu_custom_call.1} parent=1 // pred_check_branch
      %64 = sbr.rel (0) target = $region45
    $region44: #{tpu_custom_call.1} parent=1 // pred_region
      %65 = dma.done [#allocation8], 256
    $region45: #{tpu_custom_call.1} parent=1 // pred_fallthru
      _
    %v67 = vld [vmem:[%s0] sm:$0xf]
    %v68 = vld [vmem:[%s0 + $0x4] sm:$0xf]
    %v69 = vld [vmem:[%s0 + $0x8] sm:$0xf]
    %v70 = vld [vmem:[%s0 + $0xc] sm:$0xf]
    %v71 = vld [vmem:[%s1] sm:$0xf]
    %v72 = vld [vmem:[%s1 + $0x4] sm:$0xf]
    %v73 = vld [vmem:[%s1 + $0x8] sm:$0xf]
    %v74 = vld [vmem:[%s1 + $0xc] sm:$0xf]
    %v75 = vld [vmem:[%s2] sm:$0x1]
    %v77 = vlaneseq
    %v78 = vshrl.u32 %v77, 7
    %v79 = vsub.s32 0, %v78
    %v80 = vrot.slane %v75, %v79
    %v86 = vunpack.c.l.b16 %v67
    %v87 = vunpack.c.l.b16 %v68
    %v88 = vunpack.c.l.b16 %v69
    %v89 = vunpack.c.l.b16 %v70
    %v90 = vpack.c.b16 %v87, %v86
    %v91 = vpack.c.b16 %v89, %v88
    %v96 = vunpack.c.l.b16 %v71
    %v97 = vunpack.c.l.b16 %v72
    %v98 = vunpack.c.l.b16 %v73
    %v99 = vunpack.c.l.b16 %v74
    %v100 = vpack.c.b16 %v97, %v96
    %v101 = vpack.c.b16 %v99, %v98
    %vm104 = vcmask 261120
    %v106 = vsel %vm104, %v90, 0
    %v109 = vsel %vm104, %v91, 0
    %111 = vmatprep.subr.bf16.mxu0 0
    %112 = vmatpush1.bf16.msra.mxu0 %v100
    %113 = vmatprep.subr.bf16.mxu0 0
    %114 = vmatpush1.bf16.msra.mxu0 %v101
    %115 = vmatprep.subr.bf16.mxu0 0
    %116 = vmatpush1.bf16.msra.mxu0 0
    %117 = vmatprep.subr.bf16.mxu0 0
    %118 = vmatpush1.bf16.msra.mxu0 0
    %119 = vmatprep.subr.bf16.mxu0 0
    %120 = vmatpush1.bf16.msra.mxu0 0
    %121 = vmatprep.subr.bf16.mxu0 0
    %122 = vmatpush1.bf16.msra.mxu0 0
    %123 = vmatprep.subr.bf16.mxu0 0
    %124 = vmatpush1.bf16.msra.mxu0 0
    %125 = vmatprep.subr.bf16.mxu0 0
    %126 = vmatpush1.bf16.msra.mxu0 0
    %127 = vmatprep.subr.bf16.mxu0 0
    %128 = vmatpush1.bf16.msra.mxu0 0
    %129 = vmatprep.subr.bf16.mxu0 0
    %130 = vmatpush1.bf16.msra.mxu0 0
    %131 = vmatprep.subr.bf16.mxu0 0
    %132 = vmatpush1.bf16.msra.mxu0 0
    %133 = vmatprep.subr.bf16.mxu0 0
    %134 = vmatpush1.bf16.msra.mxu0 0
    %135 = vmatprep.subr.bf16.mxu0 0
    %136 = vmatpush1.bf16.msra.mxu0 0
    %137 = vmatprep.subr.bf16.mxu0 0
    %138 = vmatpush1.bf16.msra.mxu0 0
    %139 = vmatprep.subr.bf16.mxu0 0
    %140 = vmatpush1.bf16.msra.mxu0 0
    %141 = vmatprep.subr.bf16.mxu0 0
    %142 = vmatpush1.bf16.msra.mxu0 0
    %143 = vmatprep.mubr.bf16.mxu0 0
    %144 = vmatmul.mubr.bf16.gmra.mrb[0].mxu0 %v106
    %v145 = vpop.f32.mrb[0].mxu0
    %v146 = vadd.f32 %v80, %v145
    %v147 = vpop.f32.mrb[0].mxu0
    %v148 = vpop.f32.mrb[0].mxu0
    %v149 = vadd.f32 %v80, %v148
    %v150 = vpop.f32.mrb[0].mxu0
    %151 = vmatprep.mubr.bf16.mxu0 0
    %152 = vmatmul.mubr.bf16.gmra.mrb[0].mxu0 %v109
    %v153 = vpop.f32.mrb[0].mxu0
    %v154 = vadd.f32 %v80, %v153
    %v155 = vpop.f32.mrb[0].mxu0
    %v156 = vpop.f32.mrb[0].mxu0
    %v157 = vadd.f32 %v80, %v156
    %v158 = vpop.f32.mrb[0].mxu0
    %159 = vdwg.mxu0
    %v160 = vmul.f32 %v146, %v146
    %v161 = vmul.f32 %v149, %v149
    %v162 = vmul.f32 %v154, %v154
    %v163 = vmul.f32 %v157, %v157
    %vm164 = vcmask 130048
    %v165 = vsel %vm164, %v160, 0.0
    %166 = vadd.xlane.f32.xlu0 %v165
    %v167 = vpop.xlane.xlu0 %166
    %v168 = vsel %vm164, %v161, 0.0
    %169 = vadd.xlane.f32.xlu0 %v168
    %v170 = vpop.xlane.xlu0 %169
    %v171 = vsel %vm164, %v162, 0.0
    %172 = vadd.xlane.f32.xlu0 %v171
    %v173 = vpop.xlane.xlu0 %172
    %v174 = vsel %vm164, %v163, 0.0
    %175 = vadd.xlane.f32.xlu0 %v174
    %v176 = vpop.xlane.xlu0 %175
    %v177 = vrsqrt.pop %v167
    %v178 = vrsqrt.pop %v170
    %v179 = vrsqrt.pop %v173
    %v180 = vrsqrt.pop %v176
    %v181 = vmul.f32 %v146, %v177
    %v182 = vmul.f32 %v149, %v178
    %v183 = vmul.f32 %v154, %v179
    %v184 = vmul.f32 %v157, %v180
    %v185 = vld [vmem:[%s5] sm:$0xff]
    %v186 = vld [vmem:[%s5 + $0x8] sm:$0xff]
    %v187 = vmul.f32 %v146, %v185
    %v188 = vmul.f32 %v149, %v186
    %v189 = vmul.f32 %v154, %v185
    %v190 = vmul.f32 %v157, %v186
    %v191 = vsel %vm164, %v187, 0.0
    %v192 = vsel %vm164, %v188, 0.0
    %v193 = vadd.f32 %v191, %v192
    %v194 = vrot.slane %v193, 4
    %v195 = vadd.f32 %v193, %v194
    %v196 = vrot.slane %v195, 2
    %v197 = vadd.f32 %v195, %v196
    %v198 = vrot.slane %v197, 1
    %v199 = vadd.f32 %v197, %v198
    %v200 = vsel %vm164, %v189, 0.0
    %v201 = vsel %vm164, %v190, 0.0
    %v202 = vadd.f32 %v200, %v201
    %v203 = vrot.slane %v202, 4
    %v204 = vadd.f32 %v202, %v203
    %v205 = vrot.slane %v204, 2
    %v206 = vadd.f32 %v204, %v205
    %v207 = vrot.slane %v206, 1
    %v208 = vadd.f32 %v206, %v207
    %v209 = vld [vmem:[#allocation7] sm:$0xff]
    %v210 = vld [vmem:[#allocation7 + $0x8] sm:$0xff]
    %v211 = vmul.f32 %v181, %v209
    %v212 = vmul.f32 %v182, %v210
    %v213 = vmul.f32 %v183, %v209
    %v214 = vmul.f32 %v184, %v210
    %v215 = vsel %vm164, %v211, 0.0
    %v216 = vsel %vm164, %v212, 0.0
    %v217 = vadd.f32 %v215, %v216
    %v218 = vrot.slane %v217, 4
    %v219 = vadd.f32 %v217, %v218
    %v220 = vrot.slane %v219, 2
    %v221 = vadd.f32 %v219, %v220
    %v222 = vrot.slane %v221, 1
    %v223 = vadd.f32 %v221, %v222
    %v224 = vsel %vm164, %v213, 0.0
    %v225 = vsel %vm164, %v214, 0.0
    %v226 = vadd.f32 %v224, %v225
    %v227 = vrot.slane %v226, 4
    %v228 = vadd.f32 %v226, %v227
    %v229 = vrot.slane %v228, 2
    %v230 = vadd.f32 %v228, %v229
    %v231 = vrot.slane %v230, 1
    %v232 = vadd.f32 %v230, %v231
    %v233 = vld [vmem:[#allocation4] sm:$0xff]
    %v234 = vld [vmem:[#allocation4 + $0x8] sm:$0xff]
    %s235 = sld [smem:[#allocation2]]
    %v236 = vstv %s235
    %vm239 = vcmask 1041409
    %v240 = vsel %vm239, %v208, %v199
    %v241 = vsel %vm164, %v240, 0
    %243 = vmatprep.subr.mxu0 0.0
    %244 = vmatpush1.msra.mxu0 %v233
    %245 = vmatprep.subr.mxu0 0.0
    %246 = vmatpush1.msra.mxu0 %v234
    %247 = vmatprep.subr.mxu0 0.0
    %248 = vmatpush1.msra.mxu0 0.0
    %249 = vmatprep.subr.mxu0 0.0
    %250 = vmatpush1.msra.mxu0 0.0
    %251 = vmatprep.subr.mxu0 0.0
    %252 = vmatpush1.msra.mxu0 0.0
    %253 = vmatprep.subr.mxu0 0.0
    %254 = vmatpush1.msra.mxu0 0.0
    %255 = vmatprep.subr.mxu0 0.0
    %256 = vmatpush1.msra.mxu0 0.0
    %257 = vmatprep.subr.mxu0 0.0
    %258 = vmatpush1.msra.mxu0 0.0
    %259 = vmatprep.subr.mxu0 0.0
    %260 = vmatpush1.msra.mxu0 0.0
    %261 = vmatprep.subr.mxu0 0.0
    %262 = vmatpush1.msra.mxu0 0.0
    %263 = vmatprep.subr.mxu0 0.0
    %264 = vmatpush1.msra.mxu0 0.0
    %265 = vmatprep.subr.mxu0 0.0
    %266 = vmatpush1.msra.mxu0 0.0
    %267 = vmatprep.subr.mxu0 0.0
    %268 = vmatpush1.msra.mxu0 0.0
    %269 = vmatprep.subr.mxu0 0.0
    %270 = vmatpush1.msra.mxu0 0.0
    %271 = vmatprep.subr.mxu0 0.0
    %272 = vmatpush1.msra.mxu0 0.0
    %273 = vmatprep.subr.mxu0 0.0
    %274 = vmatpush1.msra.mxu0 0.0
    %275 = vmatprep.subr.mxu0 0.0
    %276 = vmatpush1.msra.mxu0 0.0
    %277 = vmatprep.subr.mxu0 0.0
    %278 = vmatpush1.msra.mxu0 0.0
    %279 = vmatprep.subr.mxu0 0.0
    %280 = vmatpush1.msra.mxu0 0.0
    %281 = vmatprep.subr.mxu0 0.0
    %282 = vmatpush1.msra.mxu0 0.0
    %283 = vmatprep.subr.mxu0 0.0
    %284 = vmatpush1.msra.mxu0 0.0
    %285 = vmatprep.subr.mxu0 0.0
    %286 = vmatpush1.msra.mxu0 0.0
    %287 = vmatprep.subr.mxu0 0.0
    %288 = vmatpush1.msra.mxu0 0.0
    %289 = vmatprep.subr.mxu0 0.0
    %290 = vmatpush1.msra.mxu0 0.0
    %291 = vmatprep.subr.mxu0 0.0
    %292 = vmatpush1.msra.mxu0 0.0
    %293 = vmatprep.subr.mxu0 0.0
    %294 = vmatpush1.msra.mxu0 0.0
    %295 = vmatprep.subr.mxu0 0.0
    %296 = vmatpush1.msra.mxu0 0.0
    %297 = vmatprep.subr.mxu0 0.0
    %298 = vmatpush1.msra.mxu0 0.0
    %299 = vmatprep.subr.mxu0 0.0
    %300 = vmatpush1.msra.mxu0 0.0
    %301 = vmatprep.subr.mxu0 0.0
    %302 = vmatpush1.msra.mxu0 0.0
    %303 = vmatprep.subr.mxu0 0.0
    %304 = vmatpush1.msra.mxu0 0.0
    %305 = vmatprep.subr.mxu0 0.0
    %306 = vmatpush1.msra.mxu0 0.0
    %307 = vmatprep.mubr.f32.mxu0 0.0
    %308 = vmatmul.mubr.f32.gmra.mrb[0].mxu0 %v241
    %v309 = vpop.f32.mrb[0].mxu0
    %v310 = vadd.f32 %v236, %v309
    %v311 = vpop.f32.mrb[0].mxu0
    %312 = vdwg.mxu0
    %313 = vst [vmem:[#allocation9] sm:$0x3] %v310
    %v314 = vld [vmem:[%s3] sm:$0xff]
    %v315 = vld [vmem:[%s3 + $0x8] sm:$0xff]
    %s316 = sld [smem:[#allocation3]]
    %v317 = vstv %s316
    %v320 = vsel %vm239, %v232, %v223
    %v321 = vsel %vm164, %v320, 0
    %323 = vmatprep.subr.mxu0 0.0
    %324 = vmatpush1.msra.mxu0 %v314
    %325 = vmatprep.subr.mxu0 0.0
    %326 = vmatpush1.msra.mxu0 %v315
    %327 = vmatprep.subr.mxu0 0.0
    %328 = vmatpush1.msra.mxu0 0.0
    %329 = vmatprep.subr.mxu0 0.0
    %330 = vmatpush1.msra.mxu0 0.0
    %331 = vmatprep.subr.mxu0 0.0
    %332 = vmatpush1.msra.mxu0 0.0
    %333 = vmatprep.subr.mxu0 0.0
    %334 = vmatpush1.msra.mxu0 0.0
    %335 = vmatprep.subr.mxu0 0.0
    %336 = vmatpush1.msra.mxu0 0.0
    %337 = vmatprep.subr.mxu0 0.0
    %338 = vmatpush1.msra.mxu0 0.0
    %339 = vmatprep.subr.mxu0 0.0
    %340 = vmatpush1.msra.mxu0 0.0
    %341 = vmatprep.subr.mxu0 0.0
    %342 = vmatpush1.msra.mxu0 0.0
    %343 = vmatprep.subr.mxu0 0.0
    %344 = vmatpush1.msra.mxu0 0.0
    %345 = vmatprep.subr.mxu0 0.0
    %346 = vmatpush1.msra.mxu0 0.0
    %347 = vmatprep.subr.mxu0 0.0
    %348 = vmatpush1.msra.mxu0 0.0
    %349 = vmatprep.subr.mxu0 0.0
    %350 = vmatpush1.msra.mxu0 0.0
    %351 = vmatprep.subr.mxu0 0.0
    %352 = vmatpush1.msra.mxu0 0.0
    %353 = vmatprep.subr.mxu0 0.0
    %354 = vmatpush1.msra.mxu0 0.0
    %355 = vmatprep.subr.mxu0 0.0
    %356 = vmatpush1.msra.mxu0 0.0
    %357 = vmatprep.subr.mxu0 0.0
    %358 = vmatpush1.msra.mxu0 0.0
    %359 = vmatprep.subr.mxu0 0.0
    %360 = vmatpush1.msra.mxu0 0.0
    %361 = vmatprep.subr.mxu0 0.0
    %362 = vmatpush1.msra.mxu0 0.0
    %363 = vmatprep.subr.mxu0 0.0
    %364 = vmatpush1.msra.mxu0 0.0
    %365 = vmatprep.subr.mxu0 0.0
    %366 = vmatpush1.msra.mxu0 0.0
    %367 = vmatprep.subr.mxu0 0.0
    %368 = vmatpush1.msra.mxu0 0.0
    %369 = vmatprep.subr.mxu0 0.0
    %370 = vmatpush1.msra.mxu0 0.0
    %371 = vmatprep.subr.mxu0 0.0
    %372 = vmatpush1.msra.mxu0 0.0
    %373 = vmatprep.subr.mxu0 0.0
    %374 = vmatpush1.msra.mxu0 0.0
    %375 = vmatprep.subr.mxu0 0.0
    %376 = vmatpush1.msra.mxu0 0.0
    %377 = vmatprep.subr.mxu0 0.0
    %378 = vmatpush1.msra.mxu0 0.0
    %379 = vmatprep.subr.mxu0 0.0
    %380 = vmatpush1.msra.mxu0 0.0
    %381 = vmatprep.subr.mxu0 0.0
    %382 = vmatpush1.msra.mxu0 0.0
    %383 = vmatprep.subr.mxu0 0.0
    %384 = vmatpush1.msra.mxu0 0.0
    %385 = vmatprep.subr.mxu0 0.0
    %386 = vmatpush1.msra.mxu0 0.0
    %387 = vmatprep.mubr.f32.mxu0 0.0
    %388 = vmatmul.mubr.f32.gmra.mrb[0].mxu0 %v321
    %v389 = vpop.f32.mrb[0].mxu0
    %v390 = vadd.f32 %v317, %v389
    %v391 = vpop.f32.mrb[0].mxu0
    %392 = vdwg.mxu0
    %393 = vst [vmem:[#allocation10] sm:$0x3] %v390
    // Predicated region
    $region46: #{tpu_custom_call.1} parent=1 // pred_check
      _
    $region47: #{tpu_custom_call.1} parent=1 // pred_check_branch
      %395 = sbr.rel (0) target = $region49
    $region48: #{tpu_custom_call.1} parent=1 // pred_region
      %s397 = ssub.s32 32, 32
      %398 = vsyncadd [#allocation6], %s397
      %s400 = sshll.u32 [#allocation9], 4
      %s401 = int_to_ptr.vmem [resolvable:$true] %s400
      %403 = dma.vmem_to_hbm [thread:$0]  %s401, 32, %s9, [#allocation6]
    $region49: #{tpu_custom_call.1} parent=1 // pred_fallthru
      _
    // Predicated region
    $region50: #{tpu_custom_call.1} parent=1 // pred_check
      _
    $region51: #{tpu_custom_call.1} parent=1 // pred_check_branch
      %405 = sbr.rel (0) target = $region53
    $region52: #{tpu_custom_call.1} parent=1 // pred_region
      %s407 = ssub.s32 32, 32
      %408 = vsyncadd [#allocation11], %s407
      %s410 = sshll.u32 [#allocation10], 4
      %s411 = int_to_ptr.vmem [resolvable:$true] %s410
      %413 = dma.vmem_to_hbm [thread:$0]  %s411, 32, %s10, [#allocation11]
    $region53: #{tpu_custom_call.1} parent=1 // pred_fallthru
      _
    // Predicated region
    $region54: #{tpu_custom_call.1} parent=1 // pred_check
      _
    $region55: #{tpu_custom_call.1} parent=1 // pred_check_branch
      %415 = sbr.rel (0) target = $region57
    $region56: #{tpu_custom_call.1} parent=1 // pred_region
      %416 = dma.done [#allocation6], 32
    $region57: #{tpu_custom_call.1} parent=1 // pred_fallthru
      _
    // Predicated region
    $region58: #{tpu_custom_call.1} parent=1 // pred_check
      _
    $region59: #{tpu_custom_call.1} parent=1 // pred_check_branch
      %418 = sbr.rel (0) target = $region61
    $region60: #{tpu_custom_call.1} parent=1 // pred_region
      %419 = dma.done [#allocation11], 32
    $region61: #{tpu_custom_call.1} parent=1 // pred_fallthru
      _
    %420 = vsyncpa [#allocation5], 1
    %421 = vsyncpa [#allocation8], 1
    %422 = vsyncpa [#allocation6], 1
    %423 = vsyncpa [#allocation11], 1

</llo_original>
